<compile_context>
chip_gen: v6e
topology: v6e:2x2x1
jax: 0.10.0
libtpu: 0.0.40
codegen_flags: <defaults>
</compile_context>

<pallas_src>
import jax
import jax.numpy as jnp
from jax.experimental import pallas as pl
from jax.experimental.pallas import tpu as pltpu


def _mlp_kernel(x_ref, w1_ref, b1_ref, w2_ref, b2_ref, w3_ref, b3_ref,
                w4_ref, b4_ref, o_ref):
    """Fused 4-layer MLP on one (channels, tokens) tile.

    x_ref : (in_c, tn) tile, tokens on the lane axis.
    w*_ref: transposed, pre-scaled weights (out_dim, in_dim), VMEM-resident.
    b*_ref: pre-scaled biases (out_dim, 1), broadcast along lanes.
    o_ref : (out_c, tn) output tile (lane-dense, unmasked store).
    """
    f32 = jnp.float32

    def silu(g):
        # sigmoid(z) = 0.5*(1 + tanh(0.5*z)): a single EUP op (tanh) instead
        # of exp + reciprocal.  Swish's *softplus(beta) and /1.1 were folded
        # into the weights, so plain SiLU here is exact.
        return g * (0.5 * (jnp.tanh(g * 0.5) + 1.0))

    g = jnp.dot(w1_ref[...], x_ref[...], preferred_element_type=f32) + b1_ref[...]
    a = silu(g).astype(w2_ref.dtype)
    g = jnp.dot(w2_ref[...], a, preferred_element_type=f32) + b2_ref[...]
    a = silu(g).astype(w3_ref.dtype)
    g = jnp.dot(w3_ref[...], a, preferred_element_type=f32) + b3_ref[...]
    a = silu(g).astype(w4_ref.dtype)
    y = jnp.dot(w4_ref[...], a, preferred_element_type=f32) + b4_ref[...]
    o_ref[...] = y.astype(o_ref.dtype)


def mlp_estimator_forward(x, params, factor, *, tile_tokens=1024, matmul_dtype=None):
    """Forward pass of MLPEstimator.

    x: (B, in_c, T)  (the PyTorch 3-D path, native layout)  or  (N, in_c).
    params: dict with w1 (in_c,hidden), b1 (hidden,), w2/b2, w3/b3
            (hidden,hidden)/(hidden,), w4 (hidden,out_c), b4 (out_c,),
            betas (3,) -- the three Swish beta parameters.
    factor: output scale.
    matmul_dtype: optional dtype (e.g. jnp.bfloat16) for the MXU operands
            (x and weights); accumulation and activation math stay f32.
    """
    f32 = jnp.float32
    orig_dtype = x.dtype

    # --- Fold softplus(beta_i), 1/1.1 and `factor` into the weights (exact
    # rescaling, recomputed inside the trace so runtime `betas` are honored):
    #   g1 = x W1' + b1';  g_{i+1} = SiLU(g_i) W'_{i+1} + b'_{i+1};  y = g4
    sp = jax.nn.softplus(params["betas"].astype(f32))
    sp1, sp2, sp3 = sp[0], sp[1], sp[2]
    inv11 = f32(1.0 / 1.1)

    w1 = params["w1"].astype(f32) * sp1
    b1 = params["b1"].astype(f32) * sp1
    w2 = params["w2"].astype(f32) * (inv11 * sp2 / sp1)
    b2 = params["b2"].astype(f32) * sp2
    w3 = params["w3"].astype(f32) * (inv11 * sp3 / sp2)
    b3 = params["b3"].astype(f32) * sp3
    w4 = params["w4"].astype(f32) * (f32(factor) * inv11 / sp3)
    b4 = params["b4"].astype(f32) * f32(factor)

    in_c, hidden = w1.shape
    out_c = w4.shape[1]

    # Transposed weights: kernel computes g^T = W^T x^T (tokens on lanes).
    w_dt = matmul_dtype if matmul_dtype is not None else f32
    w1t = w1.T.astype(w_dt)          # (hidden, in_c)
    w2t = w2.T.astype(w_dt)          # (hidden, hidden)
    w3t = w3.T.astype(w_dt)          # (hidden, hidden)
    w4t = w4.T.astype(w_dt)          # (out_c, hidden)
    b1c = b1.reshape(hidden, 1)
    b2c = b2.reshape(hidden, 1)
    b3c = b3.reshape(hidden, 1)
    b4c = b4.reshape(out_c, 1)

    # --- Input layout: channels on the sublane axis, tokens on the lane axis.
    # 3-D (B, C, T) is already in this layout -> no transpose at all.
    flatten3d = x.ndim == 3
    if flatten3d:
        x3 = x
    else:
        x3 = x.T[None]               # (N, C) -> (1, C, N): one small transpose
    if matmul_dtype is not None:
        x3 = x3.astype(w_dt)
    B, _, T = x3.shape

    # --- Token tiling: big lane-dense tiles; no padding -- the partial last
    # block is masked by Pallas (columns are independent, so this is exact).
    tile_tokens = max(128, (tile_tokens // 128) * 128)
    tn = T if T <= tile_tokens else tile_tokens
    num_t = pl.cdiv(T, tn)

    # VMEM budget: resident weights (x2 buffers) + live activations, with
    # headroom, capped at 64 MiB so the same config also fits v7x.
    weight_bytes = sum(int(a.size) * a.dtype.itemsize
                       for a in (w1t, w2t, w3t, w4t, b1c, b2c, b3c, b4c))
    act_bytes = (in_c + out_c) * tn * x3.dtype.itemsize + 4 * hidden * tn * 4
    vmem_limit = int(min(64 * 2**20,
                         max(32 * 2**20, 2 * weight_bytes + 3 * act_bytes)))

    const = lambda b, t: (0, 0)      # weights/biases: same block every step -> VMEM resident

    out3 = pl.pallas_call(
        _mlp_kernel,
        out_shape=jax.ShapeDtypeStruct((B, out_c, T), orig_dtype),
        grid_spec=pltpu.PrefetchScalarGridSpec(
            num_scalar_prefetch=0,
            grid=(B, num_t),
            in_specs=[
                pl.BlockSpec((None, in_c, tn), lambda b, t: (b, 0, t)),  # x tile
                pl.BlockSpec((hidden, in_c), const),                     # w1^T
                pl.BlockSpec((hidden, 1), const),                        # b1
                pl.BlockSpec((hidden, hidden), const),                   # w2^T
                pl.BlockSpec((hidden, 1), const),                        # b2
                pl.BlockSpec((hidden, hidden), const),                   # w3^T
                pl.BlockSpec((hidden, 1), const),                        # b3
                pl.BlockSpec((out_c, hidden), const),                    # w4^T
                pl.BlockSpec((out_c, 1), const),                         # b4
            ],
            out_specs=pl.BlockSpec((None, out_c, tn), lambda b, t: (b, 0, t)),
        ),
        compiler_params=pltpu.CompilerParams(
            # Independent output tiles along both axes.
            dimension_semantics=("parallel", "parallel"),
            vmem_limit_bytes=vmem_limit,
        ),
    )(x3, w1t, b1c, w2t, b2c, w3t, b3c, w4t, b4c)

    if flatten3d:
        return out3                  # (B, out_c, T): already the module's output layout
    return out3[0].T                 # (out_c, N) -> (N, out_c)


if __name__ == "__main__":
    key = jax.random.PRNGKey(0)
    in_c, out_c, hidden, factor = 4, 4, 32, 0.5
    keys = jax.random.split(key, 8)

    def init_linear(k, fan_in, fan_out):
        kw, kb = jax.random.split(k)
        bound = 1.0 / float(fan_in) ** 0.5
        w = jax.random.uniform(kw, (fan_in, fan_out), minval=-bound, maxval=bound,
                               dtype=jnp.float32)
        b = jax.random.uniform(kb, (fan_out,), minval=-bound, maxval=bound,
                               dtype=jnp.float32)
        return w, b

    w1, b1 = init_linear(keys[1], in_c, hidden)
    w2, b2 = init_linear(keys[2], hidden, hidden)
    w3, b3 = init_linear(keys[3], hidden, hidden)
    w4, b4 = init_linear(keys[4], hidden, out_c)
    betas = jnp.array([0.5, 0.5, 0.5], dtype=jnp.float32)  # Parameter(tensor([0.5])) x3
    params = dict(w1=w1, b1=b1, w2=w2, b2=b2, w3=w3, b3=b3, w4=w4, b4=b4,
                  betas=betas)

    # Pure-JAX reference (same math as the PyTorch module).
    def ref_forward(xin):
        def swish(h, beta):
            return (h * jax.nn.sigmoid(h * jax.nn.softplus(beta))) / 1.1
        def net(h):
            h = swish(h @ w1 + b1, betas[0])
            h = swish(h @ w2 + b2, betas[1])
            h = swish(h @ w3 + b3, betas[2])
            return (h @ w4 + b4) * factor
        if xin.ndim == 3:
            return jnp.transpose(net(jnp.transpose(xin, (0, 2, 1))), (0, 2, 1))
        return net(xin)

    # 1) Small 3-D input (B, C, T): native layout, single token tile.
    x3d = jax.random.normal(keys[0], (2, in_c, 16), dtype=jnp.float32)
    out = jax.block_until_ready(mlp_estimator_forward(x3d, params, factor))
    ref = ref_forward(x3d)
    assert out.shape == ref.shape and out.dtype == x3d.dtype
    assert jnp.allclose(out, ref, atol=1e-4, rtol=1e-4)

    # 2) 3-D input whose token count does not divide the tile: exercises the
    #    no-pad partial-block path (grid = cdiv(T, tn)).
    x3d_big = jax.random.normal(keys[5], (2, in_c, 300), dtype=jnp.float32)
    out_big = jax.block_until_ready(
        mlp_estimator_forward(x3d_big, params, factor, tile_tokens=128))
    ref_big = ref_forward(x3d_big)
    assert out_big.shape == ref_big.shape
    assert jnp.allclose(out_big, ref_big, atol=1e-4, rtol=1e-4)

    # 3) 2-D input (N, in_c) path of MLPEstimator.forward.
    x2d = jax.random.normal(keys[6], (10, in_c), dtype=jnp.float32)
    out2 = jax.block_until_ready(mlp_estimator_forward(x2d, params, factor))
    ref2 = ref_forward(x2d)
    assert out2.shape == ref2.shape
    assert jnp.allclose(out2, ref2, atol=1e-4, rtol=1e-4)

    print("KERNEL_OK")
</pallas_src>

<mosaic_0001>
module attributes {stable_mosaic.version = 11 : i64} {
  func.func @_mlp_kernel(%arg0: i32, %arg1: i32, %arg2: memref<1x4x16xf32, #tpu.memory_space<vmem>>, %arg3: memref<32x4xf32, #tpu.memory_space<vmem>>, %arg4: memref<32x1xf32, #tpu.memory_space<vmem>>, %arg5: memref<32x32xf32, #tpu.memory_space<vmem>>, %arg6: memref<32x1xf32, #tpu.memory_space<vmem>>, %arg7: memref<32x32xf32, #tpu.memory_space<vmem>>, %arg8: memref<32x1xf32, #tpu.memory_space<vmem>>, %arg9: memref<4x32xf32, #tpu.memory_space<vmem>>, %arg10: memref<4x1xf32, #tpu.memory_space<vmem>>, %arg11: memref<1x4x16xf32, #tpu.memory_space<vmem>>) attributes {dimension_semantics = [#tpu.dimension_semantics<parallel>, #tpu.dimension_semantics<parallel>], iteration_bounds = array<i64: 2, 1>, scalar_prefetch = 0 : i64, scratch_operands = 0 : i64, tpu.core_type = #tpu.core_type<tc>, window_params = [{transform_indices = @transform_0, window_bounds = array<i64: 1, 4, 16>}, {pipeline_mode = #tpu.pipeline_mode<synchronous>, transform_indices = @transform_1, window_bounds = array<i64: 32, 4>}, {pipeline_mode = #tpu.pipeline_mode<synchronous>, transform_indices = @transform_2, window_bounds = array<i64: 32, 1>}, {pipeline_mode = #tpu.pipeline_mode<synchronous>, transform_indices = @transform_3, window_bounds = array<i64: 32, 32>}, {pipeline_mode = #tpu.pipeline_mode<synchronous>, transform_indices = @transform_4, window_bounds = array<i64: 32, 1>}, {pipeline_mode = #tpu.pipeline_mode<synchronous>, transform_indices = @transform_5, window_bounds = array<i64: 32, 32>}, {pipeline_mode = #tpu.pipeline_mode<synchronous>, transform_indices = @transform_6, window_bounds = array<i64: 32, 1>}, {pipeline_mode = #tpu.pipeline_mode<synchronous>, transform_indices = @transform_7, window_bounds = array<i64: 4, 32>}, {pipeline_mode = #tpu.pipeline_mode<synchronous>, transform_indices = @transform_8, window_bounds = array<i64: 4, 1>}, {transform_indices = @transform_9, window_bounds = array<i64: 1, 4, 16>}]} {
    %c0 = arith.constant 0 : index
    %c0_0 = arith.constant 0 : index
    %0 = vector.load %arg3[%c0, %c0_0] : memref<32x4xf32, #tpu.memory_space<vmem>>, vector<32x4xf32>
    %c0_1 = arith.constant 0 : index
    %c0_2 = arith.constant 0 : index
    %c0_3 = arith.constant 0 : index
    %1 = vector.load %arg2[%c0_1, %c0_2, %c0_3] : memref<1x4x16xf32, #tpu.memory_space<vmem>>, vector<1x4x16xf32>
    %2 = vector.shape_cast %1 : vector<1x4x16xf32> to vector<4x16xf32>
    %cst = arith.constant dense<0.000000e+00> : vector<32x16xf32>
    %3 = tpu.matmul %0, %2, %cst {dimension_numbers = #tpu.dot_dimension_numbers<[1], [0], [0], [1], [0, 0, 1, 1], [], []>} : vector<32x4xf32>, vector<4x16xf32>, vector<32x16xf32> -> vector<32x16xf32>
    %c0_4 = arith.constant 0 : index
    %c0_5 = arith.constant 0 : index
    %4 = vector.load %arg4[%c0_4, %c0_5] : memref<32x1xf32, #tpu.memory_space<vmem>>, vector<32x1xf32>
    %5 = vector.broadcast %4 : vector<32x1xf32> to vector<32x16xf32>
    %6 = arith.addf %3, %5 : vector<32x16xf32>
    %cst_6 = arith.constant 5.000000e-01 : f32
    %7 = vector.broadcast %cst_6 : f32 to vector<32x16xf32>
    %8 = arith.mulf %6, %7 : vector<32x16xf32>
    %9 = math.tanh %8 : vector<32x16xf32>
    %cst_7 = arith.constant 1.000000e+00 : f32
    %10 = vector.broadcast %cst_7 : f32 to vector<32x16xf32>
    %11 = arith.addf %9, %10 : vector<32x16xf32>
    %cst_8 = arith.constant 5.000000e-01 : f32
    %12 = vector.broadcast %cst_8 : f32 to vector<32x16xf32>
    %13 = arith.mulf %12, %11 : vector<32x16xf32>
    %14 = arith.mulf %6, %13 : vector<32x16xf32>
    %c0_9 = arith.constant 0 : index
    %c0_10 = arith.constant 0 : index
    %15 = vector.load %arg5[%c0_9, %c0_10] : memref<32x32xf32, #tpu.memory_space<vmem>>, vector<32x32xf32>
    %cst_11 = arith.constant dense<0.000000e+00> : vector<32x16xf32>
    %16 = tpu.matmul %15, %14, %cst_11 {dimension_numbers = #tpu.dot_dimension_numbers<[1], [0], [0], [1], [0, 0, 1, 1], [], []>} : vector<32x32xf32>, vector<32x16xf32>, vector<32x16xf32> -> vector<32x16xf32>
    %c0_12 = arith.constant 0 : index
    %c0_13 = arith.constant 0 : index
    %17 = vector.load %arg6[%c0_12, %c0_13] : memref<32x1xf32, #tpu.memory_space<vmem>>, vector<32x1xf32>
    %18 = vector.broadcast %17 : vector<32x1xf32> to vector<32x16xf32>
    %19 = arith.addf %16, %18 : vector<32x16xf32>
    %cst_14 = arith.constant 5.000000e-01 : f32
    %20 = vector.broadcast %cst_14 : f32 to vector<32x16xf32>
    %21 = arith.mulf %19, %20 : vector<32x16xf32>
    %22 = math.tanh %21 : vector<32x16xf32>
    %cst_15 = arith.constant 1.000000e+00 : f32
    %23 = vector.broadcast %cst_15 : f32 to vector<32x16xf32>
    %24 = arith.addf %22, %23 : vector<32x16xf32>
    %cst_16 = arith.constant 5.000000e-01 : f32
    %25 = vector.broadcast %cst_16 : f32 to vector<32x16xf32>
    %26 = arith.mulf %25, %24 : vector<32x16xf32>
    %27 = arith.mulf %19, %26 : vector<32x16xf32>
    %c0_17 = arith.constant 0 : index
    %c0_18 = arith.constant 0 : index
    %28 = vector.load %arg7[%c0_17, %c0_18] : memref<32x32xf32, #tpu.memory_space<vmem>>, vector<32x32xf32>
    %cst_19 = arith.constant dense<0.000000e+00> : vector<32x16xf32>
    %29 = tpu.matmul %28, %27, %cst_19 {dimension_numbers = #tpu.dot_dimension_numbers<[1], [0], [0], [1], [0, 0, 1, 1], [], []>} : vector<32x32xf32>, vector<32x16xf32>, vector<32x16xf32> -> vector<32x16xf32>
    %c0_20 = arith.constant 0 : index
    %c0_21 = arith.constant 0 : index
    %30 = vector.load %arg8[%c0_20, %c0_21] : memref<32x1xf32, #tpu.memory_space<vmem>>, vector<32x1xf32>
    %31 = vector.broadcast %30 : vector<32x1xf32> to vector<32x16xf32>
    %32 = arith.addf %29, %31 : vector<32x16xf32>
    %cst_22 = arith.constant 5.000000e-01 : f32
    %33 = vector.broadcast %cst_22 : f32 to vector<32x16xf32>
    %34 = arith.mulf %32, %33 : vector<32x16xf32>
    %35 = math.tanh %34 : vector<32x16xf32>
    %cst_23 = arith.constant 1.000000e+00 : f32
    %36 = vector.broadcast %cst_23 : f32 to vector<32x16xf32>
    %37 = arith.addf %35, %36 : vector<32x16xf32>
    %cst_24 = arith.constant 5.000000e-01 : f32
    %38 = vector.broadcast %cst_24 : f32 to vector<32x16xf32>
    %39 = arith.mulf %38, %37 : vector<32x16xf32>
    %40 = arith.mulf %32, %39 : vector<32x16xf32>
    %c0_25 = arith.constant 0 : index
    %c0_26 = arith.constant 0 : index
    %41 = vector.load %arg9[%c0_25, %c0_26] : memref<4x32xf32, #tpu.memory_space<vmem>>, vector<4x32xf32>
    %cst_27 = arith.constant dense<0.000000e+00> : vector<4x16xf32>
    %42 = tpu.matmul %41, %40, %cst_27 {dimension_numbers = #tpu.dot_dimension_numbers<[1], [0], [0], [1], [0, 0, 1, 1], [], []>} : vector<4x32xf32>, vector<32x16xf32>, vector<4x16xf32> -> vector<4x16xf32>
    %c0_28 = arith.constant 0 : index
    %c0_29 = arith.constant 0 : index
    %43 = vector.load %arg10[%c0_28, %c0_29] : memref<4x1xf32, #tpu.memory_space<vmem>>, vector<4x1xf32>
    %44 = vector.broadcast %43 : vector<4x1xf32> to vector<4x16xf32>
    %45 = arith.addf %42, %44 : vector<4x16xf32>
    %c0_30 = arith.constant 0 : index
    %c0_31 = arith.constant 0 : index
    %c0_32 = arith.constant 0 : index
    %46 = vector.load %arg11[%c0_30, %c0_31, %c0_32] : memref<1x4x16xf32, #tpu.memory_space<vmem>>, vector<1x4x16xf32>
    %47 = vector.shape_cast %46 : vector<1x4x16xf32> to vector<4x16xf32>
    %48 = vector.shape_cast %45 : vector<4x16xf32> to vector<1x4x16xf32>
    tpu.vector_store %arg11[%c0_30, %c0_31, %c0_32], %48 {strides = array<i32>} : memref<1x4x16xf32, #tpu.memory_space<vmem>>, vector<1x4x16xf32>,
    return
  }
  func.func @transform_0(%arg0: i32, %arg1: i32) -> (i32, i32, i32) {
    %c0_i32 = arith.constant 0 : i32
    %c0_i32_0 = arith.constant 0 : i32
    return %arg0, %c0_i32, %arg1 : i32, i32, i32
  }
  func.func @transform_1(%arg0: i32, %arg1: i32) -> (i32, i32) {
    %c0_i32 = arith.constant 0 : i32
    %c0_i32_0 = arith.constant 0 : i32
    %c0_i32_1 = arith.constant 0 : i32
    return %c0_i32, %c0_i32_0 : i32, i32
  }
  func.func @transform_2(%arg0: i32, %arg1: i32) -> (i32, i32) {
    %c0_i32 = arith.constant 0 : i32
    %c0_i32_0 = arith.constant 0 : i32
    %c0_i32_1 = arith.constant 0 : i32
    return %c0_i32, %c0_i32_0 : i32, i32
  }
  func.func @transform_3(%arg0: i32, %arg1: i32) -> (i32, i32) {
    %c0_i32 = arith.constant 0 : i32
    %c0_i32_0 = arith.constant 0 : i32
    %c0_i32_1 = arith.constant 0 : i32
    return %c0_i32, %c0_i32_0 : i32, i32
  }
  func.func @transform_4(%arg0: i32, %arg1: i32) -> (i32, i32) {
    %c0_i32 = arith.constant 0 : i32
    %c0_i32_0 = arith.constant 0 : i32
    %c0_i32_1 = arith.constant 0 : i32
    return %c0_i32, %c0_i32_0 : i32, i32
  }
  func.func @transform_5(%arg0: i32, %arg1: i32) -> (i32, i32) {
    %c0_i32 = arith.constant 0 : i32
    %c0_i32_0 = arith.constant 0 : i32
    %c0_i32_1 = arith.constant 0 : i32
    return %c0_i32, %c0_i32_0 : i32, i32
  }
  func.func @transform_6(%arg0: i32, %arg1: i32) -> (i32, i32) {
    %c0_i32 = arith.constant 0 : i32
    %c0_i32_0 = arith.constant 0 : i32
    %c0_i32_1 = arith.constant 0 : i32
    return %c0_i32, %c0_i32_0 : i32, i32
  }
  func.func @transform_7(%arg0: i32, %arg1: i32) -> (i32, i32) {
    %c0_i32 = arith.constant 0 : i32
    %c0_i32_0 = arith.constant 0 : i32
    %c0_i32_1 = arith.constant 0 : i32
    return %c0_i32, %c0_i32_0 : i32, i32
  }
  func.func @transform_8(%arg0: i32, %arg1: i32) -> (i32, i32) {
    %c0_i32 = arith.constant 0 : i32
    %c0_i32_0 = arith.constant 0 : i32
    %c0_i32_1 = arith.constant 0 : i32
    return %c0_i32, %c0_i32_0 : i32, i32
  }
  func.func @transform_9(%arg0: i32, %arg1: i32) -> (i32, i32, i32) {
    %c0_i32 = arith.constant 0 : i32
    %c0_i32_0 = arith.constant 0 : i32
    return %arg0, %c0_i32, %arg1 : i32, i32, i32
  }
}

</mosaic_0001>

<llo_original>
// kernel: tpu_custom_call.1
$region0: #{tpu_custom_call.1}
  #allocation0 [shape = 'u32[]', space=smem, size = 0x4, offset = 0x4, fixed_abs, tag = 'smem constant byte address 0x4 - core index']
  #allocation1 [shape = 'u32[144,128]{1,0:T(1,128)}', space=vmem, size = 0x12000, scoped, tag = 'internal scratch']
  %s0 = inlined_call_operand.vmem [shape: f32[2,4,16], index: 0, kind: input, shape index: {}]
  %s1 = inlined_call_operand.vmem [shape: f32[32,4], index: 1, kind: input, shape index: {}]
  %s2 = inlined_call_operand.vmem [shape: f32[32,1], index: 2, kind: input, shape index: {}]
  %s3 = inlined_call_operand.vmem [shape: f32[32,32], index: 3, kind: input, shape index: {}]
  %s4 = inlined_call_operand.vmem [shape: f32[32,1], index: 4, kind: input, shape index: {}]
  %s5 = inlined_call_operand.vmem [shape: f32[32,32], index: 5, kind: input, shape index: {}]
  %s6 = inlined_call_operand.vmem [shape: f32[32,1], index: 6, kind: input, shape index: {}]
  %s7 = inlined_call_operand.vmem [shape: f32[4,32], index: 7, kind: input, shape index: {}]
  %s8 = inlined_call_operand.vmem [shape: f32[4,1], index: 8, kind: input, shape index: {}]
  %s9 = inlined_call_operand.hbm [shape: f32[2,4,16], index: 9, kind: output, shape index: {}]
  %s10 = sld [smem:[#allocation0]]
  $region69: #{tpu_custom_call.1} parent=0
    _
  %s12 = ssub.s32 1, %s10
  %s13 = scalar_select 0, %s12, %s10
  $region1: #{tpu_custom_call.1} parent=0
    #allocation2 [shape = 'u8[4096]{0}', space=vmem, size = 0x1000, scoped, tag = 'output window, operand 0']
    #allocation3 [shape = 's32[2]{0}', space=sflag, size = 0x8, scoped, tag = 'scoped memory for tpu_custom_call.1']
    %14 = vsyncpa [#allocation3], 0
    %s15 = scalar_lea.sflag [#allocation3], 1
    %16 = vsyncpa %s15, 0
    loop: start=0, step=1, limit=4
    $region2: #{tpu_custom_call.1} parent=1 // loop_pre_header
      _
    $region3: #{tpu_custom_call.1} parent=1 // loop_header
      %s18 = sphi 0, %s22
      %p19 = scmp.ge.s32.totalorder %s18, 4
      %s25 = sphi 0, %s37
      %s26 = sphi 0, %s33
      %s27 = sphi 0, %s25
      %s28 = sphi 0, %s26
      %s29 = sphi 0, %s27
      %s30 = sphi 0, %s28
      %s42 = sphi 0, %s44
      %s45 = sphi 0, %s42
      %s46 = sphi 0, %s45
      %s62 = sphi 0, %s46
      %s66 = sphi 0, %s66
      %s68 = sphi 0, %s66
      %s69 = sphi 0, %s68
      %s83 = sphi 0, %s69
      %s87 = sphi 0, %s87
      %s89 = sphi 0, %s87
      %s90 = sphi 0, %s89
      %s104 = sphi 0, %s90
      %s108 = sphi 0, %s108
      %s110 = sphi 0, %s108
      %s111 = sphi 0, %s110
      %s125 = sphi 0, %s111
      %s129 = sphi 0, %s129
      %s131 = sphi 0, %s129
      %s132 = sphi 0, %s131
      %s146 = sphi 0, %s132
      %s150 = sphi 0, %s150
      %s152 = sphi 0, %s150
      %s153 = sphi 0, %s152
      %s167 = sphi 0, %s153
      %s171 = sphi 0, %s171
      %s173 = sphi 0, %s171
      %s174 = sphi 0, %s173
      %s188 = sphi 0, %s174
      %s192 = sphi 0, %s192
      %s194 = sphi 0, %s192
      %s195 = sphi 0, %s194
      %s209 = sphi 0, %s195
      %s213 = sphi 0, %s213
      %s215 = sphi 0, %s213
      %s216 = sphi 0, %s215
      %s230 = sphi 0, %s216
      %s238 = sphi 0, %s240
      %s241 = sphi 0, %s238
      %s242 = sphi 0, %s241
      %s258 = sphi 0, %s242
    $region4: #{tpu_custom_call.1} parent=1 // loop_header_branch
      %21 = sbr.rel (%p19) target = $region8
    $region5: #{tpu_custom_call.1} parent=1 // loop_body
      %s23 = ssub.s32 %s18, 1
      %s24 = ssub.s32 %s18, 2
      %s31 = sadd.s32 1, %s26
      %p32 = scmp.ge.s32.totalorder %s31, 1
      %s33 = scalar_select %p32, 0, %s31
      %s34 = sadd.s32 1, %s25
      %s35 = scalar_select %p32, %s34, %s25
      %p36 = scmp.ge.s32.totalorder %s35, 2
      %s37 = scalar_select %p36, 0, %s35
      %s38 = ssub.s32 %s25, %s37
      %s39 = ssub.s32 %s26, %s33
      %s40 = sor.u32 %s38, %s39
      %p41 = scmp.eq.s32.totalorder %s40, 0
      %s43 = sadd.s32 %s42, 1
      %s44 = scalar_select %p41, %s42, %s43
      %p47 = pneg %p41
      %p48 = scmp.eq.s32.totalorder %s18, 1
      %p49 = por %p47, %p48
      %p50 = scmp.ne.s32.totalorder %s42, %s45
      %p51 = scmp.eq.s32.totalorder %s18, 0
      %p52 = por %p50, %p51
      %p53 = scmp.ne.s32.totalorder %s42, %s45
      %p54 = scmp.eq.s32.totalorder %s23, 1
      %p55 = por %p53, %p54
      %p56 = scmp.ne.s32.totalorder %s45, %s46
      %p57 = scmp.eq.s32.totalorder %s23, 0
      %p58 = por %p56, %p57
      %p59 = scmp.ne.s32.totalorder %s45, %s46
      %p60 = scmp.eq.s32.totalorder %s24, 1
      %p61 = por %p59, %p60
      %p63 = scmp.ne.s32.totalorder %s46, %s62
      %p64 = scmp.eq.s32.totalorder %s24, 0
      %p65 = por %p63, %p64
      %s67 = sadd.s32 %s66, 1
      %p70 = scmp.eq.s32.totalorder %s18, 1
      %p71 = scmp.ne.s32.totalorder %s66, %s68
      %p72 = scmp.eq.s32.totalorder %s18, 0
      %p73 = por %p71, %p72
      %p74 = scmp.ne.s32.totalorder %s66, %s68
      %p75 = scmp.eq.s32.totalorder %s23, 1
      %p76 = por %p74, %p75
      %p77 = scmp.ne.s32.totalorder %s68, %s69
      %p78 = scmp.eq.s32.totalorder %s23, 0
      %p79 = por %p77, %p78
      %p80 = scmp.ne.s32.totalorder %s68, %s69
      %p81 = scmp.eq.s32.totalorder %s24, 1
      %p82 = por %p80, %p81
      %p84 = scmp.ne.s32.totalorder %s69, %s83
      %p85 = scmp.eq.s32.totalorder %s24, 0
      %p86 = por %p84, %p85
      %s88 = sadd.s32 %s87, 1
      %p91 = scmp.eq.s32.totalorder %s18, 1
      %p92 = scmp.ne.s32.totalorder %s87, %s89
      %p93 = scmp.eq.s32.totalorder %s18, 0
      %p94 = por %p92, %p93
      %p95 = scmp.ne.s32.totalorder %s87, %s89
      %p96 = scmp.eq.s32.totalorder %s23, 1
      %p97 = por %p95, %p96
      %p98 = scmp.ne.s32.totalorder %s89, %s90
      %p99 = scmp.eq.s32.totalorder %s23, 0
      %p100 = por %p98, %p99
      %p101 = scmp.ne.s32.totalorder %s89, %s90
      %p102 = scmp.eq.s32.totalorder %s24, 1
      %p103 = por %p101, %p102
      %p105 = scmp.ne.s32.totalorder %s90, %s104
      %p106 = scmp.eq.s32.totalorder %s24, 0
      %p107 = por %p105, %p106
      %s109 = sadd.s32 %s108, 1
      %p112 = scmp.eq.s32.totalorder %s18, 1
      %p113 = scmp.ne.s32.totalorder %s108, %s110
      %p114 = scmp.eq.s32.totalorder %s18, 0
      %p115 = por %p113, %p114
      %p116 = scmp.ne.s32.totalorder %s108, %s110
      %p117 = scmp.eq.s32.totalorder %s23, 1
      %p118 = por %p116, %p117
      %p119 = scmp.ne.s32.totalorder %s110, %s111
      %p120 = scmp.eq.s32.totalorder %s23, 0
      %p121 = por %p119, %p120
      %p122 = scmp.ne.s32.totalorder %s110, %s111
      %p123 = scmp.eq.s32.totalorder %s24, 1
      %p124 = por %p122, %p123
      %p126 = scmp.ne.s32.totalorder %s111, %s125
      %p127 = scmp.eq.s32.totalorder %s24, 0
      %p128 = por %p126, %p127
      %s130 = sadd.s32 %s129, 1
      %p133 = scmp.eq.s32.totalorder %s18, 1
      %p134 = scmp.ne.s32.totalorder %s129, %s131
      %p135 = scmp.eq.s32.totalorder %s18, 0
      %p136 = por %p134, %p135
      %p137 = scmp.ne.s32.totalorder %s129, %s131
      %p138 = scmp.eq.s32.totalorder %s23, 1
      %p139 = por %p137, %p138
      %p140 = scmp.ne.s32.totalorder %s131, %s132
      %p141 = scmp.eq.s32.totalorder %s23, 0
      %p142 = por %p140, %p141
      %p143 = scmp.ne.s32.totalorder %s131, %s132
      %p144 = scmp.eq.s32.totalorder %s24, 1
      %p145 = por %p143, %p144
      %p147 = scmp.ne.s32.totalorder %s132, %s146
      %p148 = scmp.eq.s32.totalorder %s24, 0
      %p149 = por %p147, %p148
      %s151 = sadd.s32 %s150, 1
      %p154 = scmp.eq.s32.totalorder %s18, 1
      %p155 = scmp.ne.s32.totalorder %s150, %s152
      %p156 = scmp.eq.s32.totalorder %s18, 0
      %p157 = por %p155, %p156
      %p158 = scmp.ne.s32.totalorder %s150, %s152
      %p159 = scmp.eq.s32.totalorder %s23, 1
      %p160 = por %p158, %p159
      %p161 = scmp.ne.s32.totalorder %s152, %s153
      %p162 = scmp.eq.s32.totalorder %s23, 0
      %p163 = por %p161, %p162
      %p164 = scmp.ne.s32.totalorder %s152, %s153
      %p165 = scmp.eq.s32.totalorder %s24, 1
      %p166 = por %p164, %p165
      %p168 = scmp.ne.s32.totalorder %s153, %s167
      %p169 = scmp.eq.s32.totalorder %s24, 0
      %p170 = por %p168, %p169
      %s172 = sadd.s32 %s171, 1
      %p175 = scmp.eq.s32.totalorder %s18, 1
      %p176 = scmp.ne.s32.totalorder %s171, %s173
      %p177 = scmp.eq.s32.totalorder %s18, 0
      %p178 = por %p176, %p177
      %p179 = scmp.ne.s32.totalorder %s171, %s173
      %p180 = scmp.eq.s32.totalorder %s23, 1
      %p181 = por %p179, %p180
      %p182 = scmp.ne.s32.totalorder %s173, %s174
      %p183 = scmp.eq.s32.totalorder %s23, 0
      %p184 = por %p182, %p183
      %p185 = scmp.ne.s32.totalorder %s173, %s174
      %p186 = scmp.eq.s32.totalorder %s24, 1
      %p187 = por %p185, %p186
      %p189 = scmp.ne.s32.totalorder %s174, %s188
      %p190 = scmp.eq.s32.totalorder %s24, 0
      %p191 = por %p189, %p190
      %s193 = sadd.s32 %s192, 1
      %p196 = scmp.eq.s32.totalorder %s18, 1
      %p197 = scmp.ne.s32.totalorder %s192, %s194
      %p198 = scmp.eq.s32.totalorder %s18, 0
      %p199 = por %p197, %p198
      %p200 = scmp.ne.s32.totalorder %s192, %s194
      %p201 = scmp.eq.s32.totalorder %s23, 1
      %p202 = por %p200, %p201
      %p203 = scmp.ne.s32.totalorder %s194, %s195
      %p204 = scmp.eq.s32.totalorder %s23, 0
      %p205 = por %p203, %p204
      %p206 = scmp.ne.s32.totalorder %s194, %s195
      %p207 = scmp.eq.s32.totalorder %s24, 1
      %p208 = por %p206, %p207
      %p210 = scmp.ne.s32.totalorder %s195, %s209
      %p211 = scmp.eq.s32.totalorder %s24, 0
      %p212 = por %p210, %p211
      %s214 = sadd.s32 %s213, 1
      %p217 = scmp.eq.s32.totalorder %s18, 1
      %p218 = scmp.ne.s32.totalorder %s213, %s215
      %p219 = scmp.eq.s32.totalorder %s18, 0
      %p220 = por %p218, %p219
      %p221 = scmp.ne.s32.totalorder %s213, %s215
      %p222 = scmp.eq.s32.totalorder %s23, 1
      %p223 = por %p221, %p222
      %p224 = scmp.ne.s32.totalorder %s215, %s216
      %p225 = scmp.eq.s32.totalorder %s23, 0
      %p226 = por %p224, %p225
      %p227 = scmp.ne.s32.totalorder %s215, %s216
      %p228 = scmp.eq.s32.totalorder %s24, 1
      %p229 = por %p227, %p228
      %p231 = scmp.ne.s32.totalorder %s216, %s230
      %p232 = scmp.eq.s32.totalorder %s24, 0
      %p233 = por %p231, %p232
      %s234 = ssub.s32 %s25, %s37
      %s235 = ssub.s32 %s26, %s33
      %s236 = sor.u32 %s234, %s235
      %p237 = scmp.eq.s32.totalorder %s236, 0
      %s239 = sadd.s32 %s238, 1
      %s240 = scalar_select %p237, %s238, %s239
      %p243 = pneg %p237
      %p244 = scmp.eq.s32.totalorder %s18, 1
      %p245 = por %p243, %p244
      %p246 = scmp.ne.s32.totalorder %s238, %s241
      %p247 = scmp.eq.s32.totalorder %s18, 0
      %p248 = por %p246, %p247
      %p249 = scmp.ne.s32.totalorder %s238, %s241
      %p250 = scmp.eq.s32.totalorder %s23, 1
      %p251 = por %p249, %p250
      %p252 = scmp.ne.s32.totalorder %s241, %s242
      %p253 = scmp.eq.s32.totalorder %s23, 0
      %p254 = por %p252, %p253
      %p255 = scmp.ne.s32.totalorder %s241, %s242
      %p256 = scmp.eq.s32.totalorder %s24, 1
      %p257 = por %p255, %p256
      %p259 = scmp.ne.s32.totalorder %s242, %s258
      %p260 = scmp.eq.s32.totalorder %s24, 0
      %p261 = por %p259, %p260
      %p262 = scmp.le.s32.totalorder 1, %s18
      %p263 = scmp.lt.s32.totalorder %s18, 3
      %p264 = pnand %p262, %p263
      %p265 = pneg %p264
      // Predicated region
      $region9: #{tpu_custom_call.1} parent=5 // pred_check
        _
      $region10: #{tpu_custom_call.1} parent=5 // pred_check_branch
        %267 = sbr.rel (%p264) target = $region12
      $region11: #{tpu_custom_call.1} parent=5 // pred_region
        %s268 = ssub.s32 %s18, 1
        // Predicated region
        $region13: #{tpu_custom_call.1} parent=11 // pred_check
          %p269 = pneg %p79
        $region14: #{tpu_custom_call.1} parent=11 // pred_check_branch
          %271 = sbr.rel (%p269) target = $region16
        $region15: #{tpu_custom_call.1} parent=11 // pred_region
          _
        $region16: #{tpu_custom_call.1} parent=11 // pred_fallthru
          _
        // Predicated region
        $region17: #{tpu_custom_call.1} parent=11 // pred_check
          %p272 = pneg %p100
        $region18: #{tpu_custom_call.1} parent=11 // pred_check_branch
          %274 = sbr.rel (%p272) target = $region20
        $region19: #{tpu_custom_call.1} parent=11 // pred_region
          _
        $region20: #{tpu_custom_call.1} parent=11 // pred_fallthru
          _
        // Predicated region
        $region21: #{tpu_custom_call.1} parent=11 // pred_check
          %p275 = pneg %p121
        $region22: #{tpu_custom_call.1} parent=11 // pred_check_branch
          %277 = sbr.rel (%p275) target = $region24
        $region23: #{tpu_custom_call.1} parent=11 // pred_region
          _
        $region24: #{tpu_custom_call.1} parent=11 // pred_fallthru
          _
        // Predicated region
        $region25: #{tpu_custom_call.1} parent=11 // pred_check
          %p278 = pneg %p142
        $region26: #{tpu_custom_call.1} parent=11 // pred_check_branch
          %280 = sbr.rel (%p278) target = $region28
        $region27: #{tpu_custom_call.1} parent=11 // pred_region
          _
        $region28: #{tpu_custom_call.1} parent=11 // pred_fallthru
          _
        // Predicated region
        $region29: #{tpu_custom_call.1} parent=11 // pred_check
          %p281 = pneg %p163
        $region30: #{tpu_custom_call.1} parent=11 // pred_check_branch
          %283 = sbr.rel (%p281) target = $region32
        $region31: #{tpu_custom_call.1} parent=11 // pred_region
          _
        $region32: #{tpu_custom_call.1} parent=11 // pred_fallthru
          _
        // Predicated region
        $region33: #{tpu_custom_call.1} parent=11 // pred_check
          %p284 = pneg %p184
        $region34: #{tpu_custom_call.1} parent=11 // pred_check_branch
          %286 = sbr.rel (%p284) target = $region36
        $region35: #{tpu_custom_call.1} parent=11 // pred_region
          _
        $region36: #{tpu_custom_call.1} parent=11 // pred_fallthru
          _
        // Predicated region
        $region37: #{tpu_custom_call.1} parent=11 // pred_check
          %p287 = pneg %p205
        $region38: #{tpu_custom_call.1} parent=11 // pred_check_branch
          %289 = sbr.rel (%p287) target = $region40
        $region39: #{tpu_custom_call.1} parent=11 // pred_region
          _
        $region40: #{tpu_custom_call.1} parent=11 // pred_fallthru
          _
        // Predicated region
        $region41: #{tpu_custom_call.1} parent=11 // pred_check
          %p290 = pneg %p226
        $region42: #{tpu_custom_call.1} parent=11 // pred_check_branch
          %292 = sbr.rel (%p290) target = $region44
        $region43: #{tpu_custom_call.1} parent=11 // pred_region
          _
        $region44: #{tpu_custom_call.1} parent=11 // pred_fallthru
          _
      $region12: #{tpu_custom_call.1} parent=5 // pred_fallthru
        _
      %p293 = scmp.lt.s32.totalorder %s18, 2
      // Predicated region
      $region45: #{tpu_custom_call.1} parent=5 // pred_check
        %p294 = pneg %p293
      $region46: #{tpu_custom_call.1} parent=5 // pred_check_branch
        %296 = sbr.rel (%p294) target = $region48
      $region47: #{tpu_custom_call.1} parent=5 // pred_region
        // Predicated region
        $region49: #{tpu_custom_call.1} parent=47 // pred_check
          %p297 = pneg %p52
        $region50: #{tpu_custom_call.1} parent=47 // pred_check_branch
          %299 = sbr.rel (%p297) target = $region52
        $region51: #{tpu_custom_call.1} parent=47 // pred_region
          %p300 = scmp.lt.s32.totalorder %s25, 1
          %s301 = scalar_select %p300, %s25, 1
          %p302 = scmp.lt.s32.totalorder %s26, 0
          %s303 = scalar_select %p302, %s26, 0
          %s304 = sadd.s32 %s303, %s301
          %s305 = smul.addr %s304, 4
          %s306 = scalar_lea.vmem %s0, %s305
        $region52: #{tpu_custom_call.1} parent=47 // pred_fallthru
          _
      $region48: #{tpu_custom_call.1} parent=5 // pred_fallthru
        _
      %p307 = scmp.le.s32.totalorder 1, %s18
      %p308 = scmp.lt.s32.totalorder %s18, 3
      %p309 = pnand %p307, %p308
      %p310 = pneg %p309
      // Predicated region
      $region53: #{tpu_custom_call.1} parent=5 // pred_check
        _
      $region54: #{tpu_custom_call.1} parent=5 // pred_check_branch
        %312 = sbr.rel (%p309) target = $region56
      $region55: #{tpu_custom_call.1} parent=5 // pred_region
        %s313 = ssub.s32 %s18, 1
        %p314 = scmp.lt.s32.totalorder %s27, 1
        %s315 = scalar_select %p314, %s27, 1
        %p316 = scmp.lt.s32.totalorder %s28, 0
        %s317 = scalar_select %p316, %s28, 0
        %s318 = sadd.s32 %s317, %s315
        %s319 = smul.addr %s318, 4
        %s320 = scalar_lea.vmem %s0, %s319
        %p321 = pneg %p58
        %p322 = pneg %p55
        %p323 = pneg %p79
        %p324 = pneg %p76
        %p325 = pneg %p100
        %p326 = pneg %p97
        %p327 = pneg %p121
        %p328 = pneg %p118
        %p329 = pneg %p142
        %p330 = pneg %p139
        %p331 = pneg %p163
        %p332 = pneg %p160
        %p333 = pneg %p184
        %p334 = pneg %p181
        %p335 = pneg %p205
        %p336 = pneg %p202
        %p337 = pneg %p226
        %p338 = pneg %p223
        %p339 = pneg %p254
        %p340 = pneg %p251
        %s341 = sand.u32 %s241, 1
        %s342 = scalar_lea.sflag [#allocation3], %s341
        %s343 = sand.u32 %s241, 1
        %s344 = smul.addr %s343, 4
        %s345 = scalar_lea.vmem [#allocation2], %s344
        %p346 = scmp.lt.s32.totalorder %s27, 1
        %s347 = scalar_select %p346, %s27, 1
        %p348 = scmp.lt.s32.totalorder %s28, 0
        %s349 = scalar_select %p348, %s28, 0
        %s350 = sadd.s32 %s349, %s347
        %s351 = smul.addr %s350, 4
        %s352 = scalar_lea.vmem %s0, %s351
        %v353 = vld [vmem:[%s1] sm:$0xff]
        %v354 = vld [vmem:[%s1 + $0x8] sm:$0xff]
        %v355 = vld [vmem:[%s1 + $0x10] sm:$0xff]
        %v356 = vld [vmem:[%s1 + $0x18] sm:$0xff]
        %v357 = vld [vmem:[%s352] sm:$0xf]
        %v358 = vld [vmem:[%s2] sm:$0xff]
        %v359 = vld [vmem:[%s2 + $0x8] sm:$0xff]
        %v360 = vld [vmem:[%s2 + $0x10] sm:$0xff]
        %v361 = vld [vmem:[%s2 + $0x18] sm:$0xff]
        %363 = vset.pattern.permute.xlu0 0
        %364 = vperm.xlu0 %363, %v358
        %v365 = vpop.permute.xlu0 %364
        %368 = vset.pattern.permute.xlu0 0
        %369 = vperm.xlu0 %368, %v359
        %v370 = vpop.permute.xlu0 %369
        %373 = vset.pattern.permute.xlu0 0
        %374 = vperm.xlu0 %373, %v360
        %v375 = vpop.permute.xlu0 %374
        %378 = vset.pattern.permute.xlu0 0
        %379 = vperm.xlu0 %378, %v361
        %v380 = vpop.permute.xlu0 %379
        %vm382 = vcmask 31744
        %v384 = vsel %vm382, %v353, 0
        %v387 = vsel %vm382, %v354, 0
        %v390 = vsel %vm382, %v355, 0
        %v393 = vsel %vm382, %v356, 0
        %vm395 = vcmask 1043456
        %v397 = vsel %vm395, %v357, 0
        %399 = vmatprep.subr.mxu0 0.0
        %400 = vmatpush1.msra.mxu0 0.0
        %401 = vmatprep.subr.mxu0 0.0
        %402 = vmatpush1.msra.mxu0 0.0
        %403 = vmatprep.subr.mxu0 0.0
        %404 = vmatpush1.msra.mxu0 0.0
        %405 = vmatprep.subr.mxu0 0.0
        %406 = vmatpush1.msra.mxu0 0.0
        %407 = vmatprep.subr.mxu0 0.0
        %408 = vmatpush1.msra.mxu0 0.0
        %409 = vmatprep.subr.mxu0 0.0
        %410 = vmatpush1.msra.mxu0 0.0
        %411 = vmatprep.subr.mxu0 0.0
        %412 = vmatpush1.msra.mxu0 0.0
        %413 = vmatprep.subr.mxu0 0.0
        %414 = vmatpush1.msra.mxu0 0.0
        %415 = vmatprep.subr.mxu0 0.0
        %416 = vmatpush1.msra.mxu0 0.0
        %417 = vmatprep.subr.mxu0 0.0
        %418 = vmatpush1.msra.mxu0 0.0
        %419 = vmatprep.subr.mxu0 0.0
        %420 = vmatpush1.msra.mxu0 0.0
        %421 = vmatprep.subr.mxu0 0.0
        %422 = vmatpush1.msra.mxu0 0.0
        %423 = vmatprep.subr.mxu0 0.0
        %424 = vmatpush1.msra.mxu0 0.0
        %425 = vmatprep.subr.mxu0 0.0
        %426 = vmatpush1.msra.mxu0 0.0
        %427 = vmatprep.subr.mxu0 0.0
        %428 = vmatpush1.msra.mxu0 0.0
        %429 = vmatprep.subr.mxu0 0.0
        %430 = vmatpush1.msra.mxu0 %v397
        %431 = vmatprep.subr.mxu0 0.0
        %432 = vmatpush2.msra.mxu0 0.0
        %433 = vmatprep.subr.mxu0 0.0
        %434 = vmatpush2.msra.mxu0 0.0
        %435 = vmatprep.subr.mxu0 0.0
        %436 = vmatpush2.msra.mxu0 0.0
        %437 = vmatprep.subr.mxu0 0.0
        %438 = vmatpush2.msra.mxu0 0.0
        %439 = vmatprep.subr.mxu0 0.0
        %440 = vmatpush2.msra.mxu0 0.0
        %441 = vmatprep.subr.mxu0 0.0
        %442 = vmatpush2.msra.mxu0 0.0
        %443 = vmatprep.subr.mxu0 0.0
        %444 = vmatpush2.msra.mxu0 0.0
        %445 = vmatprep.subr.mxu0 0.0
        %446 = vmatpush2.msra.mxu0 0.0
        %447 = vmatprep.subr.mxu0 0.0
        %448 = vmatpush2.msra.mxu0 0.0
        %449 = vmatprep.subr.mxu0 0.0
        %450 = vmatpush2.msra.mxu0 0.0
        %451 = vmatprep.subr.mxu0 0.0
        %452 = vmatpush2.msra.mxu0 0.0
        %453 = vmatprep.subr.mxu0 0.0
        %454 = vmatpush2.msra.mxu0 0.0
        %455 = vmatprep.subr.mxu0 0.0
        %456 = vmatpush2.msra.mxu0 0.0
        %457 = vmatprep.subr.mxu0 0.0
        %458 = vmatpush2.msra.mxu0 0.0
        %459 = vmatprep.subr.mxu0 0.0
        %460 = vmatpush2.msra.mxu0 0.0
        %461 = vmatprep.subr.mxu0 0.0
        %462 = vmatpush2.msra.mxu0 0.0
        %463 = vmatprep.mubr.f32.mxu0 0.0
        %464 = vmatmul.mubr.f32.gmra.mxu0 %v384
        %v465 = vpop.f32.mrf.mxu0
        %v466 = vadd.f32 %v365, %v465
        %v467 = vpop.f32.mrf.mxu0
        %468 = vmatprep.mubr.f32.mxu0 0.0
        %469 = vmatmul.mubr.f32.gmra.mxu0 %v387
        %v470 = vpop.f32.mrf.mxu0
        %v471 = vadd.f32 %v370, %v470
        %v472 = vpop.f32.mrf.mxu0
        %473 = vmatprep.mubr.f32.mxu0 0.0
        %474 = vmatmul.mubr.f32.gmra.mxu0 %v390
        %v475 = vpop.f32.mrf.mxu0
        %v476 = vadd.f32 %v375, %v475
        %v477 = vpop.f32.mrf.mxu0
        %478 = vmatprep.mubr.f32.mxu0 0.0
        %479 = vmatmul.mubr.f32.gmra.mxu0 %v393
        %v480 = vpop.f32.mrf.mxu0
        %v481 = vadd.f32 %v380, %v480
        %v482 = vpop.f32.mrf.mxu0
        %483 = vdwg.mxu0
        %v484 = vmul.f32 %v466, 0.5
        %v485 = vmul.f32 %v471, 0.5
        %v486 = vmul.f32 %v476, 0.5
        %v487 = vmul.f32 %v481, 0.5
        %v488 = vtanh.pop %v484
        %v489 = vtanh.pop %v485
        %v490 = vtanh.pop %v486
        %v491 = vtanh.pop %v487
        %v492 = vadd.f32 %v488, 1.0
        %v493 = vadd.f32 %v489, 1.0
        %v494 = vadd.f32 %v490, 1.0
        %v495 = vadd.f32 %v491, 1.0
        %v496 = vmul.f32 %v492, 0.5
        %v497 = vmul.f32 %v493, 0.5
        %v498 = vmul.f32 %v494, 0.5
        %v499 = vmul.f32 %v495, 0.5
        %v500 = vmul.f32 %v466, %v496
        %v501 = vmul.f32 %v471, %v497
        %v502 = vmul.f32 %v476, %v498
        %v503 = vmul.f32 %v481, %v499
        %v504 = vld [vmem:[%s3] sm:$0xff]
        %v505 = vld [vmem:[%s3 + $0x8] sm:$0xff]
        %v506 = vld [vmem:[%s3 + $0x10] sm:$0xff]
        %v507 = vld [vmem:[%s3 + $0x18] sm:$0xff]
        %v508 = vld [vmem:[%s4] sm:$0xff]
        %v509 = vld [vmem:[%s4 + $0x8] sm:$0xff]
        %v510 = vld [vmem:[%s4 + $0x10] sm:$0xff]
        %v511 = vld [vmem:[%s4 + $0x18] sm:$0xff]
        %513 = vset.pattern.permute.xlu0 0
        %514 = vperm.xlu0 %513, %v508
        %v515 = vpop.permute.xlu0 %514
        %518 = vset.pattern.permute.xlu0 0
        %519 = vperm.xlu0 %518, %v509
        %v520 = vpop.permute.xlu0 %519
        %523 = vset.pattern.permute.xlu0 0
        %524 = vperm.xlu0 %523, %v510
        %v525 = vpop.permute.xlu0 %524
        %528 = vset.pattern.permute.xlu0 0
        %529 = vperm.xlu0 %528, %v511
        %v530 = vpop.permute.xlu0 %529
        %vm532 = vcmask 261120
        %v534 = vsel %vm532, %v504, 0
        %v537 = vsel %vm532, %v505, 0
        %v540 = vsel %vm532, %v506, 0
        %v543 = vsel %vm532, %v507, 0
        %545 = vmatprep.subr.mxu0 0.0
        %546 = vmatpush1.msra.mxu0 0.0
        %547 = vmatprep.subr.mxu0 0.0
        %548 = vmatpush1.msra.mxu0 0.0
        %549 = vmatprep.subr.mxu0 0.0
        %550 = vmatpush1.msra.mxu0 0.0
        %551 = vmatprep.subr.mxu0 0.0
        %552 = vmatpush1.msra.mxu0 0.0
        %553 = vmatprep.subr.mxu0 0.0
        %554 = vmatpush1.msra.mxu0 0.0
        %555 = vmatprep.subr.mxu0 0.0
        %556 = vmatpush1.msra.mxu0 0.0
        %557 = vmatprep.subr.mxu0 0.0
        %558 = vmatpush1.msra.mxu0 0.0
        %559 = vmatprep.subr.mxu0 0.0
        %560 = vmatpush1.msra.mxu0 0.0
        %561 = vmatprep.subr.mxu0 0.0
        %562 = vmatpush1.msra.mxu0 0.0
        %563 = vmatprep.subr.mxu0 0.0
        %564 = vmatpush1.msra.mxu0 0.0
        %565 = vmatprep.subr.mxu0 0.0
        %566 = vmatpush1.msra.mxu0 0.0
        %567 = vmatprep.subr.mxu0 0.0
        %568 = vmatpush1.msra.mxu0 0.0
        %569 = vmatprep.subr.mxu0 0.0
        %570 = vmatpush1.msra.mxu0 %v503
        %571 = vmatprep.subr.mxu0 0.0
        %572 = vmatpush1.msra.mxu0 %v502
        %573 = vmatprep.subr.mxu0 0.0
        %574 = vmatpush1.msra.mxu0 %v501
        %575 = vmatprep.subr.mxu0 0.0
        %576 = vmatpush1.msra.mxu0 %v500
        %577 = vmatprep.subr.mxu0 0.0
        %578 = vmatpush2.msra.mxu0 0.0
        %579 = vmatprep.subr.mxu0 0.0
        %580 = vmatpush2.msra.mxu0 0.0
        %581 = vmatprep.subr.mxu0 0.0
        %582 = vmatpush2.msra.mxu0 0.0
        %583 = vmatprep.subr.mxu0 0.0
        %584 = vmatpush2.msra.mxu0 0.0
        %585 = vmatprep.subr.mxu0 0.0
        %586 = vmatpush2.msra.mxu0 0.0
        %587 = vmatprep.subr.mxu0 0.0
        %588 = vmatpush2.msra.mxu0 0.0
        %589 = vmatprep.subr.mxu0 0.0
        %590 = vmatpush2.msra.mxu0 0.0
        %591 = vmatprep.subr.mxu0 0.0
        %592 = vmatpush2.msra.mxu0 0.0
        %593 = vmatprep.subr.mxu0 0.0
        %594 = vmatpush2.msra.mxu0 0.0
        %595 = vmatprep.subr.mxu0 0.0
        %596 = vmatpush2.msra.mxu0 0.0
        %597 = vmatprep.subr.mxu0 0.0
        %598 = vmatpush2.msra.mxu0 0.0
        %599 = vmatprep.subr.mxu0 0.0
        %600 = vmatpush2.msra.mxu0 0.0
        %601 = vmatprep.subr.mxu0 0.0
        %602 = vmatpush2.msra.mxu0 0.0
        %603 = vmatprep.subr.mxu0 0.0
        %604 = vmatpush2.msra.mxu0 0.0
        %605 = vmatprep.subr.mxu0 0.0
        %606 = vmatpush2.msra.mxu0 0.0
        %607 = vmatprep.subr.mxu0 0.0
        %608 = vmatpush2.msra.mxu0 0.0
        %609 = vmatprep.mubr.f32.mxu0 0.0
        %610 = vmatmul.mubr.f32.gmra.mxu0 %v534
        %v611 = vpop.f32.mrf.mxu0
        %v612 = vadd.f32 %v515, %v611
        %v613 = vpop.f32.mrf.mxu0
        %614 = vmatprep.mubr.f32.mxu0 0.0
        %615 = vmatmul.mubr.f32.gmra.mxu0 %v537
        %v616 = vpop.f32.mrf.mxu0
        %v617 = vadd.f32 %v520, %v616
        %v618 = vpop.f32.mrf.mxu0
        %619 = vmatprep.mubr.f32.mxu0 0.0
        %620 = vmatmul.mubr.f32.gmra.mxu0 %v540
        %v621 = vpop.f32.mrf.mxu0
        %v622 = vadd.f32 %v525, %v621
        %v623 = vpop.f32.mrf.mxu0
        %624 = vmatprep.mubr.f32.mxu0 0.0
        %625 = vmatmul.mubr.f32.gmra.mxu0 %v543
        %v626 = vpop.f32.mrf.mxu0
        %v627 = vadd.f32 %v530, %v626
        %v628 = vpop.f32.mrf.mxu0
        %629 = vdwg.mxu0
        %v630 = vmul.f32 %v612, 0.5
        %v631 = vmul.f32 %v617, 0.5
        %v632 = vmul.f32 %v622, 0.5
        %v633 = vmul.f32 %v627, 0.5
        %v634 = vtanh.pop %v630
        %v635 = vtanh.pop %v631
        %v636 = vtanh.pop %v632
        %v637 = vtanh.pop %v633
        %v638 = vadd.f32 %v634, 1.0
        %v639 = vadd.f32 %v635, 1.0
        %v640 = vadd.f32 %v636, 1.0
        %v641 = vadd.f32 %v637, 1.0
        %v642 = vmul.f32 %v638, 0.5
        %v643 = vmul.f32 %v639, 0.5
        %v644 = vmul.f32 %v640, 0.5
        %v645 = vmul.f32 %v641, 0.5
        %v646 = vmul.f32 %v612, %v642
        %v647 = vmul.f32 %v617, %v643
        %v648 = vmul.f32 %v622, %v644
        %v649 = vmul.f32 %v627, %v645
        %v650 = vld [vmem:[%s5] sm:$0xff]
        %v651 = vld [vmem:[%s5 + $0x8] sm:$0xff]
        %v652 = vld [vmem:[%s5 + $0x10] sm:$0xff]
        %v653 = vld [vmem:[%s5 + $0x18] sm:$0xff]
        %v654 = vld [vmem:[%s6] sm:$0xff]
        %v655 = vld [vmem:[%s6 + $0x8] sm:$0xff]
        %v656 = vld [vmem:[%s6 + $0x10] sm:$0xff]
        %v657 = vld [vmem:[%s6 + $0x18] sm:$0xff]
        %659 = vset.pattern.permute.xlu0 0
        %660 = vperm.xlu0 %659, %v654
        %v661 = vpop.permute.xlu0 %660
        %664 = vset.pattern.permute.xlu0 0
        %665 = vperm.xlu0 %664, %v655
        %v666 = vpop.permute.xlu0 %665
        %669 = vset.pattern.permute.xlu0 0
        %670 = vperm.xlu0 %669, %v656
        %v671 = vpop.permute.xlu0 %670
        %674 = vset.pattern.permute.xlu0 0
        %675 = vperm.xlu0 %674, %v657
        %v676 = vpop.permute.xlu0 %675
        %v679 = vsel %vm532, %v650, 0
        %v682 = vsel %vm532, %v651, 0
        %v685 = vsel %vm532, %v652, 0
        %v688 = vsel %vm532, %v653, 0
        %690 = vmatprep.subr.mxu0 0.0
        %691 = vmatpush1.msra.mxu0 0.0
        %692 = vmatprep.subr.mxu0 0.0
        %693 = vmatpush1.msra.mxu0 0.0
        %694 = vmatprep.subr.mxu0 0.0
        %695 = vmatpush1.msra.mxu0 0.0
        %696 = vmatprep.subr.mxu0 0.0
        %697 = vmatpush1.msra.mxu0 0.0
        %698 = vmatprep.subr.mxu0 0.0
        %699 = vmatpush1.msra.mxu0 0.0
        %700 = vmatprep.subr.mxu0 0.0
        %701 = vmatpush1.msra.mxu0 0.0
        %702 = vmatprep.subr.mxu0 0.0
        %703 = vmatpush1.msra.mxu0 0.0
        %704 = vmatprep.subr.mxu0 0.0
        %705 = vmatpush1.msra.mxu0 0.0
        %706 = vmatprep.subr.mxu0 0.0
        %707 = vmatpush1.msra.mxu0 0.0
        %708 = vmatprep.subr.mxu0 0.0
        %709 = vmatpush1.msra.mxu0 0.0
        %710 = vmatprep.subr.mxu0 0.0
        %711 = vmatpush1.msra.mxu0 0.0
        %712 = vmatprep.subr.mxu0 0.0
        %713 = vmatpush1.msra.mxu0 0.0
        %714 = vmatprep.subr.mxu0 0.0
        %715 = vmatpush1.msra.mxu0 %v649
        %716 = vmatprep.subr.mxu0 0.0
        %717 = vmatpush1.msra.mxu0 %v648
        %718 = vmatprep.subr.mxu0 0.0
        %719 = vmatpush1.msra.mxu0 %v647
        %720 = vmatprep.subr.mxu0 0.0
        %721 = vmatpush1.msra.mxu0 %v646
        %722 = vmatprep.subr.mxu0 0.0
        %723 = vmatpush2.msra.mxu0 0.0
        %724 = vmatprep.subr.mxu0 0.0
        %725 = vmatpush2.msra.mxu0 0.0
        %726 = vmatprep.subr.mxu0 0.0
        %727 = vmatpush2.msra.mxu0 0.0
        %728 = vmatprep.subr.mxu0 0.0
        %729 = vmatpush2.msra.mxu0 0.0
        %730 = vmatprep.subr.mxu0 0.0
        %731 = vmatpush2.msra.mxu0 0.0
        %732 = vmatprep.subr.mxu0 0.0
        %733 = vmatpush2.msra.mxu0 0.0
        %734 = vmatprep.subr.mxu0 0.0
        %735 = vmatpush2.msra.mxu0 0.0
        %736 = vmatprep.subr.mxu0 0.0
        %737 = vmatpush2.msra.mxu0 0.0
        %738 = vmatprep.subr.mxu0 0.0
        %739 = vmatpush2.msra.mxu0 0.0
        %740 = vmatprep.subr.mxu0 0.0
        %741 = vmatpush2.msra.mxu0 0.0
        %742 = vmatprep.subr.mxu0 0.0
        %743 = vmatpush2.msra.mxu0 0.0
        %744 = vmatprep.subr.mxu0 0.0
        %745 = vmatpush2.msra.mxu0 0.0
        %746 = vmatprep.subr.mxu0 0.0
        %747 = vmatpush2.msra.mxu0 0.0
        %748 = vmatprep.subr.mxu0 0.0
        %749 = vmatpush2.msra.mxu0 0.0
        %750 = vmatprep.subr.mxu0 0.0
        %751 = vmatpush2.msra.mxu0 0.0
        %752 = vmatprep.subr.mxu0 0.0
        %753 = vmatpush2.msra.mxu0 0.0
        %754 = vmatprep.mubr.f32.mxu0 0.0
        %755 = vmatmul.mubr.f32.gmra.mxu0 %v679
        %v756 = vpop.f32.mrf.mxu0
        %v757 = vadd.f32 %v661, %v756
        %v758 = vpop.f32.mrf.mxu0
        %759 = vmatprep.mubr.f32.mxu0 0.0
        %760 = vmatmul.mubr.f32.gmra.mxu0 %v682
        %v761 = vpop.f32.mrf.mxu0
        %v762 = vadd.f32 %v666, %v761
        %v763 = vpop.f32.mrf.mxu0
        %764 = vmatprep.mubr.f32.mxu0 0.0
        %765 = vmatmul.mubr.f32.gmra.mxu0 %v685
        %v766 = vpop.f32.mrf.mxu0
        %v767 = vadd.f32 %v671, %v766
        %v768 = vpop.f32.mrf.mxu0
        %769 = vmatprep.mubr.f32.mxu0 0.0
        %770 = vmatmul.mubr.f32.gmra.mxu0 %v688
        %v771 = vpop.f32.mrf.mxu0
        %v772 = vadd.f32 %v676, %v771
        %v773 = vpop.f32.mrf.mxu0
        %774 = vdwg.mxu0
        %v775 = vmul.f32 %v757, 0.5
        %v776 = vmul.f32 %v762, 0.5
        %v777 = vmul.f32 %v767, 0.5
        %v778 = vmul.f32 %v772, 0.5
        %v779 = vtanh.pop %v775
        %v780 = vtanh.pop %v776
        %v781 = vtanh.pop %v777
        %v782 = vtanh.pop %v778
        %v783 = vadd.f32 %v779, 1.0
        %v784 = vadd.f32 %v780, 1.0
        %v785 = vadd.f32 %v781, 1.0
        %v786 = vadd.f32 %v782, 1.0
        %v787 = vmul.f32 %v783, 0.5
        %v788 = vmul.f32 %v784, 0.5
        %v789 = vmul.f32 %v785, 0.5
        %v790 = vmul.f32 %v786, 0.5
        %v791 = vmul.f32 %v757, %v787
        %v792 = vmul.f32 %v762, %v788
        %v793 = vmul.f32 %v767, %v789
        %v794 = vmul.f32 %v772, %v790
        %v795 = vld [vmem:[%s7] sm:$0xf]
        %v796 = vld [vmem:[%s8] sm:$0xf]
        %798 = vset.pattern.permute.xlu0 0
        %799 = vperm.xlu0 %798, %v796
        %v800 = vpop.permute.xlu0 %799
        %v803 = vsel %vm532, %v795, 0
        %805 = vmatprep.subr.mxu0 0.0
        %806 = vmatpush1.msra.mxu0 0.0
        %807 = vmatprep.subr.mxu0 0.0
        %808 = vmatpush1.msra.mxu0 0.0
        %809 = vmatprep.subr.mxu0 0.0
        %810 = vmatpush1.msra.mxu0 0.0
        %811 = vmatprep.subr.mxu0 0.0
        %812 = vmatpush1.msra.mxu0 0.0
        %813 = vmatprep.subr.mxu0 0.0
        %814 = vmatpush1.msra.mxu0 0.0
        %815 = vmatprep.subr.mxu0 0.0
        %816 = vmatpush1.msra.mxu0 0.0
        %817 = vmatprep.subr.mxu0 0.0
        %818 = vmatpush1.msra.mxu0 0.0
        %819 = vmatprep.subr.mxu0 0.0
        %820 = vmatpush1.msra.mxu0 0.0
        %821 = vmatprep.subr.mxu0 0.0
        %822 = vmatpush1.msra.mxu0 0.0
        %823 = vmatprep.subr.mxu0 0.0
        %824 = vmatpush1.msra.mxu0 0.0
        %825 = vmatprep.subr.mxu0 0.0
        %826 = vmatpush1.msra.mxu0 0.0
        %827 = vmatprep.subr.mxu0 0.0
        %828 = vmatpush1.msra.mxu0 0.0
        %829 = vmatprep.subr.mxu0 0.0
        %830 = vmatpush1.msra.mxu0 %v794
        %831 = vmatprep.subr.mxu0 0.0
        %832 = vmatpush1.msra.mxu0 %v793
        %833 = vmatprep.subr.mxu0 0.0
        %834 = vmatpush1.msra.mxu0 %v792
        %835 = vmatprep.subr.mxu0 0.0
        %836 = vmatpush1.msra.mxu0 %v791
        %837 = vmatprep.subr.mxu0 0.0
        %838 = vmatpush2.msra.mxu0 0.0
        %839 = vmatprep.subr.mxu0 0.0
        %840 = vmatpush2.msra.mxu0 0.0
        %841 = vmatprep.subr.mxu0 0.0
        %842 = vmatpush2.msra.mxu0 0.0
        %843 = vmatprep.subr.mxu0 0.0
        %844 = vmatpush2.msra.mxu0 0.0
        %845 = vmatprep.subr.mxu0 0.0
        %846 = vmatpush2.msra.mxu0 0.0
        %847 = vmatprep.subr.mxu0 0.0
        %848 = vmatpush2.msra.mxu0 0.0
        %849 = vmatprep.subr.mxu0 0.0
        %850 = vmatpush2.msra.mxu0 0.0
        %851 = vmatprep.subr.mxu0 0.0
        %852 = vmatpush2.msra.mxu0 0.0
        %853 = vmatprep.subr.mxu0 0.0
        %854 = vmatpush2.msra.mxu0 0.0
        %855 = vmatprep.subr.mxu0 0.0
        %856 = vmatpush2.msra.mxu0 0.0
        %857 = vmatprep.subr.mxu0 0.0
        %858 = vmatpush2.msra.mxu0 0.0
        %859 = vmatprep.subr.mxu0 0.0
        %860 = vmatpush2.msra.mxu0 0.0
        %861 = vmatprep.subr.mxu0 0.0
        %862 = vmatpush2.msra.mxu0 0.0
        %863 = vmatprep.subr.mxu0 0.0
        %864 = vmatpush2.msra.mxu0 0.0
        %865 = vmatprep.subr.mxu0 0.0
        %866 = vmatpush2.msra.mxu0 0.0
        %867 = vmatprep.subr.mxu0 0.0
        %868 = vmatpush2.msra.mxu0 0.0
        %869 = vmatprep.mubr.f32.mxu0 0.0
        %870 = vmatmul.mubr.f32.gmra.mxu0 %v803
        %v871 = vpop.f32.mrf.mxu0
        %v872 = vadd.f32 %v800, %v871
        %v873 = vpop.f32.mrf.mxu0
        %874 = vdwg.mxu0
        %vm875 = vcmask 125952
        %876 = vst.msk [vmem:[%s345] sm:$0xf] %vm875, %v872
        %s877 = sand.u32 %s241, 1
        %s878 = scalar_lea.sflag [#allocation3], %s877
        %s879 = sand.u32 %s241, 1
        %s880 = smul.addr %s879, 4
        %s881 = scalar_lea.vmem [#allocation2], %s880
        // Predicated region
        $region57: #{tpu_custom_call.1} parent=55 // pred_check
          %p882 = pneg %p251
        $region58: #{tpu_custom_call.1} parent=55 // pred_check_branch
          %884 = sbr.rel (%p882) target = $region60
        $region59: #{tpu_custom_call.1} parent=55 // pred_region
          %s886 = ssub.s32 64, 64
          %887 = vsyncadd %s878, %s886
          %s888 = sadd.s32 %s28, %s27
          %s889 = smul.addr %s888, 64
          %s890 = scalar_lea.hbm %s9, %s889
          %s892 = sshll.u32 %s881, 4
          %s893 = int_to_ptr.vmem [resolvable:$true] %s892
          %895 = dma.vmem_to_hbm [thread:$0]  %s893, 64, %s890, %s878
        $region60: #{tpu_custom_call.1} parent=55 // pred_fallthru
          _
      $region56: #{tpu_custom_call.1} parent=5 // pred_fallthru
        _
      %p896 = scmp.le.s32.totalorder 2, %s18
      // Predicated region
      $region61: #{tpu_custom_call.1} parent=5 // pred_check
        %p897 = pneg %p896
      $region62: #{tpu_custom_call.1} parent=5 // pred_check_branch
        %899 = sbr.rel (%p897) target = $region64
      $region63: #{tpu_custom_call.1} parent=5 // pred_region
        %s900 = ssub.s32 %s18, 2
        // Predicated region
        $region65: #{tpu_custom_call.1} parent=63 // pred_check
          %p901 = pneg %p257
        $region66: #{tpu_custom_call.1} parent=63 // pred_check_branch
          %903 = sbr.rel (%p901) target = $region68
        $region67: #{tpu_custom_call.1} parent=63 // pred_region
          %s904 = sand.u32 %s242, 1
          %s905 = scalar_lea.sflag [#allocation3], %s904
          %s906 = sand.u32 %s242, 1
          %s907 = smul.addr %s906, 4
          %s908 = scalar_lea.vmem [#allocation2], %s907
          %909 = dma.done %s905, 64
        $region68: #{tpu_custom_call.1} parent=63 // pred_fallthru
          _
      $region64: #{tpu_custom_call.1} parent=5 // pred_fallthru
        _
    $region6: #{tpu_custom_call.1} parent=1 // loop_footer
      %s22 = sadd.s32 1, %s18
    $region7: #{tpu_custom_call.1} parent=1 // loop_footer_branch
      %17 = sbr.rel target = $region3
    $region8: #{tpu_custom_call.1} parent=1 // loop_exit
      _
    %910 = vsyncpa [#allocation3], 1
    %s911 = scalar_lea.sflag [#allocation3], 1
    %912 = vsyncpa %s911, 1

</llo_original>
